<compile_context>
chip_gen: v7x
topology: tpu7x:2x2x1
jax: 0.10.0
libtpu: 0.0.40
codegen_flags: <defaults>
</compile_context>

<pallas_src>
import math

import jax
import jax.numpy as jnp
from jax.experimental import pallas as pl
from jax.experimental.pallas import tpu as pltpu

KERNEL = 3
STRIDE = 3  # MaxPool2d default: stride = kernel_size


def _maxpool_kh_kernel(x_ref, o_ref):
    # x_ref: (NCT, HOT, 3, WOT) -- the 3 kh offsets of each output row, W on lanes.
    # o_ref: (NCT, HOT, WOT)
    m = x_ref[:, :, 0, :]
    for k in range(1, KERNEL):                 # running max: <= 2 live slabs
        m = jnp.maximum(m, x_ref[:, :, k, :])
    o_ref[...] = m


def _out_dim(d):
    o = math.ceil((d - KERNEL) / STRIDE) + 1
    # PyTorch ceil_mode rule (padding=0): last window must start inside the input.
    if (o - 1) * STRIDE >= d:
        o -= 1
    return o


def _min_value(dtype):
    if jnp.issubdtype(dtype, jnp.floating):
        return -jnp.inf
    if jnp.issubdtype(dtype, jnp.integer):
        return jnp.iinfo(dtype).min
    return False  # bool


def _vmem_capacity_bytes():
    try:
        return int(pltpu.get_tpu_info().vmem_capacity_bytes)
    except Exception:
        return 64 * 1024 * 1024  # conservative default (v7x per-TensorCore VMEM)


def _choose_tiles(NC, Ho, Wo, itemsize, budget):
    """Largest (NCT, HOT, WOT) input block that fits a per-buffer VMEM budget."""
    sub = {4: 8, 2: 16, 1: 32}.get(itemsize, 8)   # sublane granule for this dtype

    # Lane (minor) dim: full Wo unless one padded row-group alone blows the budget.
    WOT = Wo
    lane = -(-WOT // 128) * 128
    group = sub * lane * itemsize                 # one (3->sub, WOT) slab in VMEM
    if group > budget:
        WOT = max(128, (budget // (sub * itemsize)) // 128 * 128)
        lane = WOT
        group = sub * lane * itemsize

    # Output-row tile: multiple of `sub`, or the full Ho.
    HOT = min(Ho, max(1, budget // group))
    if HOT < Ho:
        HOT = min(Ho, max(sub, (HOT // sub) * sub))

    # Fused N*C tile: only stack whole (Ho, Wo) planes (keeps DMAs contiguous).
    if HOT == Ho and WOT == Wo:
        NCT = min(NC, max(1, budget // max(1, Ho * group)))
    else:
        NCT = 1

    # v7x megacore: make sure the grid has >= 2 steps on a splittable axis.
    steps = pl.cdiv(NC, NCT) * pl.cdiv(Ho, HOT) * pl.cdiv(Wo, WOT)
    if steps == 1:
        if NC >= 2:
            NCT = -(-NC // 2)
        elif Ho >= 2 * sub:
            half = -(-Ho // 2)
            half = -(-half // sub) * sub
            if half < Ho:
                HOT = half
    return NCT, HOT, WOT


@jax.jit
def maxpool2d_k3_ceil(x):
    """MaxPool2d(kernel_size=3, stride=3, padding=0, ceil_mode=True) on NCHW input."""
    N, C, H, W = x.shape
    NC = N * C
    Ho, Wo = _out_dim(H), _out_dim(W)
    Hp = (Ho - 1) * STRIDE + KERNEL
    Wp = (Wo - 1) * STRIDE + KERNEL

    # ---- Stage 1: ONE fused XLA pass -------------------------------------------
    # ceil-mode padding on H and W + the width-direction 3-way max, no transpose.
    # Padded positions take the init value (-inf / iinfo.min), matching PyTorch.
    init = jnp.asarray(_min_value(x.dtype), dtype=x.dtype)
    xw = jax.lax.reduce_window(
        x,
        init,
        jax.lax.max,
        window_dimensions=(1, 1, 1, KERNEL),
        window_strides=(1, 1, 1, STRIDE),
        padding=((0, 0), (0, 0), (0, Hp - H), (0, Wp - W)),
    )  # (N, C, Hp, Wo)

    # Free, order-preserving reshape: group the 3 kh source rows of each output row.
    xr = xw.reshape(NC, Ho, KERNEL, Wo)

    # ---- Stage 2: Pallas kernel reduces the kh offsets --------------------------
    cap = _vmem_capacity_bytes()
    NCT, HOT, WOT = _choose_tiles(NC, Ho, Wo, x.dtype.itemsize, budget=cap // 8)

    nsteps = (pl.cdiv(NC, NCT), pl.cdiv(Ho, HOT), pl.cdiv(Wo, WOT))
    # Put the axis with the most steps first so megacore shards the leading
    # parallel dimension (v7x); harmless on single-TC chips.
    order = sorted(range(3), key=lambda a: -nsteps[a])
    grid = tuple(nsteps[a] for a in order)
    pos = {axis: i for i, axis in enumerate(order)}

    def in_map(*g):
        return (g[pos[0]], g[pos[1]], 0, g[pos[2]])

    def out_map(*g):
        return (g[pos[0]], g[pos[1]], g[pos[2]])

    out = pl.pallas_call(
        _maxpool_kh_kernel,
        out_shape=jax.ShapeDtypeStruct((NC, Ho, Wo), x.dtype),
        grid=grid,
        in_specs=[pl.BlockSpec((NCT, HOT, KERNEL, WOT), in_map)],
        out_specs=pl.BlockSpec((NCT, HOT, WOT), out_map),
        compiler_params=pltpu.CompilerParams(
            dimension_semantics=("parallel", "parallel", "parallel"),
            vmem_limit_bytes=int(min(cap // 2, 100 * 1024 * 1024)),
        ),
    )(xr)

    # (NC, Ho, Wo) -> (N, C, Ho, Wo): free reshape, no transpose.
    return out.reshape(N, C, Ho, Wo)


def _reference_maxpool(x):
    # Pure-JAX reference, structurally independent of the kernel path:
    # explicit ceil-mode pad + reshape + max over both window axes.
    N, C, H, W = x.shape
    Ho, Wo = _out_dim(H), _out_dim(W)
    Hp = (Ho - 1) * STRIDE + KERNEL
    Wp = (Wo - 1) * STRIDE + KERNEL
    xp = jnp.pad(
        x,
        ((0, 0), (0, 0), (0, Hp - H), (0, Wp - W)),
        constant_values=_min_value(x.dtype),
    )
    return xp.reshape(N, C, Ho, KERNEL, Wo, KERNEL).max(axis=(3, 5))


if __name__ == "__main__":
    key = jax.random.PRNGKey(0)
    # Small NCHW input, consistent with MaxPool2d usage: (N=2, C=4, H=16, W=16)
    x = jax.random.normal(key, (2, 4, 16, 16), dtype=jnp.float32)

    out = maxpool2d_k3_ceil(x)
    out = jax.block_until_ready(out)

    ref = _reference_maxpool(x)
    assert out.shape == (2, 4, 6, 6), out.shape
    assert jnp.allclose(out, ref), "mismatch vs reference maxpool"

    print("KERNEL_OK")
</pallas_src>

<mosaic_0001>
module attributes {stable_mosaic.version = 11 : i64} {
  func.func @_maxpool_kh_kernel(%arg0: i32, %arg1: i32, %arg2: i32, %arg3: memref<4x6x3x6xf32, #tpu.memory_space<vmem>>, %arg4: memref<4x6x6xf32, #tpu.memory_space<vmem>>) attributes {dimension_semantics = [#tpu.dimension_semantics<parallel>, #tpu.dimension_semantics<parallel>, #tpu.dimension_semantics<parallel>], iteration_bounds = array<i64: 2, 1, 1>, scalar_prefetch = 0 : i64, scratch_operands = 0 : i64, tpu.core_type = #tpu.core_type<tc>, window_params = [{transform_indices = @transform_0, window_bounds = array<i64: 4, 6, 3, 6>}, {transform_indices = @transform_1, window_bounds = array<i64: 4, 6, 6>}]} {
    %c0 = arith.constant 0 : index
    %c0_0 = arith.constant 0 : index
    %c0_1 = arith.constant 0 : index
    %c0_2 = arith.constant 0 : index
    %0 = vector.load %arg3[%c0, %c0_0, %c0_1, %c0_2] : memref<4x6x3x6xf32, #tpu.memory_space<vmem>>, vector<4x6x1x6xf32>
    %1 = vector.shape_cast %0 : vector<4x6x1x6xf32> to vector<4x6x6xf32>
    %c0_3 = arith.constant 0 : index
    %c0_4 = arith.constant 0 : index
    %c1 = arith.constant 1 : index
    %c0_5 = arith.constant 0 : index
    %2 = vector.load %arg3[%c0_3, %c0_4, %c1, %c0_5] : memref<4x6x3x6xf32, #tpu.memory_space<vmem>>, vector<4x6x1x6xf32>
    %3 = vector.shape_cast %2 : vector<4x6x1x6xf32> to vector<4x6x6xf32>
    %4 = arith.maximumf %1, %3 : vector<4x6x6xf32>
    %c0_6 = arith.constant 0 : index
    %c0_7 = arith.constant 0 : index
    %c2 = arith.constant 2 : index
    %c0_8 = arith.constant 0 : index
    %5 = vector.load %arg3[%c0_6, %c0_7, %c2, %c0_8] : memref<4x6x3x6xf32, #tpu.memory_space<vmem>>, vector<4x6x1x6xf32>
    %6 = vector.shape_cast %5 : vector<4x6x1x6xf32> to vector<4x6x6xf32>
    %7 = arith.maximumf %4, %6 : vector<4x6x6xf32>
    %c0_9 = arith.constant 0 : index
    %c0_10 = arith.constant 0 : index
    %c0_11 = arith.constant 0 : index
    %8 = vector.load %arg4[%c0_9, %c0_10, %c0_11] : memref<4x6x6xf32, #tpu.memory_space<vmem>>, vector<4x6x6xf32>
    tpu.vector_store %arg4[%c0_9, %c0_10, %c0_11], %7 {strides = array<i32>} : memref<4x6x6xf32, #tpu.memory_space<vmem>>, vector<4x6x6xf32>,
    return
  }
  func.func @transform_0(%arg0: i32, %arg1: i32, %arg2: i32) -> (i32, i32, i32, i32) {
    %c0_i32 = arith.constant 0 : i32
    %c0_i32_0 = arith.constant 0 : i32
    return %arg0, %arg1, %c0_i32, %arg2 : i32, i32, i32, i32
  }
  func.func @transform_1(%arg0: i32, %arg1: i32, %arg2: i32) -> (i32, i32, i32) {
    %c0_i32 = arith.constant 0 : i32
    return %arg0, %arg1, %arg2 : i32, i32, i32
  }
}

</mosaic_0001>

<llo_original>
// kernel: maxpool2d_k3_ceil.1
$region0: #{maxpool2d_k3_ceil.1}
  #allocation0 [shape = 'u32[]', space=smem, size = 0x4, offset = 0x4, fixed_abs, tag = 'smem constant byte address 0x4 - core index']
  #allocation1 [shape = 'u32[144,128]{1,0:T(1,128)}', space=vmem, size = 0x12000, scoped, tag = 'internal scratch']
  %s0 = inlined_call_operand.vmem [shape: f32[8,6,3,6], index: 0, kind: input, shape index: {}]
  %s1 = inlined_call_operand.vmem [shape: f32[8,6,6], index: 1, kind: output, shape index: {}]
  %s2 = sld [smem:[#allocation0]]
  $region37: #{maxpool2d_k3_ceil.1} parent=0
    _
  %s4 = ssub.s32 1, %s2
  %s5 = scalar_select 0, %s4, %s2
  loop: start=0, step=1, limit=4
  $region2: #{maxpool2d_k3_ceil.1} parent=0 // loop_pre_header
    _
  $region3: #{maxpool2d_k3_ceil.1} parent=0 // loop_header
    %s7 = sphi 0, %s11
    %p8 = scmp.ge.s32.totalorder %s7, 4
    %s14 = sphi 0, %s33
    %s15 = sphi 0, %s29
    %s16 = sphi 0, %s25
    %s17 = sphi 0, %s14
    %s18 = sphi 0, %s15
    %s19 = sphi 0, %s16
    %s20 = sphi 0, %s17
    %s21 = sphi 0, %s18
    %s22 = sphi 0, %s19
    %s40 = sphi 0, %s42
    %s43 = sphi 0, %s40
    %s44 = sphi 0, %s43
    %s60 = sphi 0, %s44
    %s70 = sphi 0, %s72
    %s73 = sphi 0, %s70
    %s74 = sphi 0, %s73
    %s90 = sphi 0, %s74
  $region4: #{maxpool2d_k3_ceil.1} parent=0 // loop_header_branch
    %10 = sbr.rel (%p8) target = $region8
  $region5: #{maxpool2d_k3_ceil.1} parent=0 // loop_body
    %s12 = ssub.s32 %s7, 1
    %s13 = ssub.s32 %s7, 2
    %s23 = sadd.s32 1, %s16
    %p24 = scmp.ge.s32.totalorder %s23, 1
    %s25 = scalar_select %p24, 0, %s23
    %s26 = sadd.s32 1, %s15
    %s27 = scalar_select %p24, %s26, %s15
    %p28 = scmp.ge.s32.totalorder %s27, 1
    %s29 = scalar_select %p28, 0, %s27
    %s30 = sadd.s32 1, %s14
    %s31 = scalar_select %p28, %s30, %s14
    %p32 = scmp.ge.s32.totalorder %s31, 2
    %s33 = scalar_select %p32, 0, %s31
    %s34 = ssub.s32 %s14, %s33
    %s35 = ssub.s32 %s15, %s29
    %s36 = sor.u32 %s34, %s35
    %s37 = ssub.s32 %s16, %s25
    %s38 = sor.u32 %s36, %s37
    %p39 = scmp.eq.s32.totalorder %s38, 0
    %s41 = sadd.s32 %s40, 1
    %s42 = scalar_select %p39, %s40, %s41
    %p45 = pneg %p39
    %p46 = scmp.eq.s32.totalorder %s7, 1
    %p47 = por %p45, %p46
    %p48 = scmp.ne.s32.totalorder %s40, %s43
    %p49 = scmp.eq.s32.totalorder %s7, 0
    %p50 = por %p48, %p49
    %p51 = scmp.ne.s32.totalorder %s40, %s43
    %p52 = scmp.eq.s32.totalorder %s12, 1
    %p53 = por %p51, %p52
    %p54 = scmp.ne.s32.totalorder %s43, %s44
    %p55 = scmp.eq.s32.totalorder %s12, 0
    %p56 = por %p54, %p55
    %p57 = scmp.ne.s32.totalorder %s43, %s44
    %p58 = scmp.eq.s32.totalorder %s13, 1
    %p59 = por %p57, %p58
    %p61 = scmp.ne.s32.totalorder %s44, %s60
    %p62 = scmp.eq.s32.totalorder %s13, 0
    %p63 = por %p61, %p62
    %s64 = ssub.s32 %s14, %s33
    %s65 = ssub.s32 %s15, %s29
    %s66 = sor.u32 %s64, %s65
    %s67 = ssub.s32 %s16, %s25
    %s68 = sor.u32 %s66, %s67
    %p69 = scmp.eq.s32.totalorder %s68, 0
    %s71 = sadd.s32 %s70, 1
    %s72 = scalar_select %p69, %s70, %s71
    %p75 = pneg %p69
    %p76 = scmp.eq.s32.totalorder %s7, 1
    %p77 = por %p75, %p76
    %p78 = scmp.ne.s32.totalorder %s70, %s73
    %p79 = scmp.eq.s32.totalorder %s7, 0
    %p80 = por %p78, %p79
    %p81 = scmp.ne.s32.totalorder %s70, %s73
    %p82 = scmp.eq.s32.totalorder %s12, 1
    %p83 = por %p81, %p82
    %p84 = scmp.ne.s32.totalorder %s73, %s74
    %p85 = scmp.eq.s32.totalorder %s12, 0
    %p86 = por %p84, %p85
    %p87 = scmp.ne.s32.totalorder %s73, %s74
    %p88 = scmp.eq.s32.totalorder %s13, 1
    %p89 = por %p87, %p88
    %p91 = scmp.ne.s32.totalorder %s74, %s90
    %p92 = scmp.eq.s32.totalorder %s13, 0
    %p93 = por %p91, %p92
    %p94 = scmp.le.s32.totalorder 1, %s7
    %p95 = scmp.lt.s32.totalorder %s7, 3
    %p96 = pnand %p94, %p95
    %p97 = pneg %p96
    // Predicated region
    $region9: #{maxpool2d_k3_ceil.1} parent=5 // pred_check
      _
    $region10: #{maxpool2d_k3_ceil.1} parent=5 // pred_check_branch
      %99 = sbr.rel (%p96) target = $region12
    $region11: #{maxpool2d_k3_ceil.1} parent=5 // pred_region
      %s100 = ssub.s32 %s7, 1
    $region12: #{maxpool2d_k3_ceil.1} parent=5 // pred_fallthru
      _
    %p101 = scmp.lt.s32.totalorder %s7, 2
    // Predicated region
    $region13: #{maxpool2d_k3_ceil.1} parent=5 // pred_check
      %p102 = pneg %p101
    $region14: #{maxpool2d_k3_ceil.1} parent=5 // pred_check_branch
      %104 = sbr.rel (%p102) target = $region16
    $region15: #{maxpool2d_k3_ceil.1} parent=5 // pred_region
      // Predicated region
      $region17: #{maxpool2d_k3_ceil.1} parent=15 // pred_check
        %p105 = pneg %p50
      $region18: #{maxpool2d_k3_ceil.1} parent=15 // pred_check_branch
        %107 = sbr.rel (%p105) target = $region20
      $region19: #{maxpool2d_k3_ceil.1} parent=15 // pred_region
        %s108 = smul.u32 4, %s14
        %s109 = smul.u32 6, %s15
        %p110 = scmp.lt.s32.totalorder %s108, 7
        %s111 = scalar_select %p110, %s108, 7
        %p112 = scmp.lt.s32.totalorder %s109, 5
        %s113 = scalar_select %p112, %s109, 5
        %p114 = scmp.lt.s32.totalorder %s16, 0
        %s115 = scalar_select %p114, %s16, 0
        %s116 = sadd.s32 %s115, %s113
        %s117 = smul.addr %s111, 6
        %s118 = sadd.s32 %s116, %s117
        %s119 = smul.addr %s118, 4
        %s120 = scalar_lea.vmem %s0, %s119
        %s121 = smul.u32 4, %s14
        %s122 = smul.u32 6, %s15
      $region20: #{maxpool2d_k3_ceil.1} parent=15 // pred_fallthru
        _
    $region16: #{maxpool2d_k3_ceil.1} parent=5 // pred_fallthru
      _
    %p123 = scmp.le.s32.totalorder 1, %s7
    %p124 = scmp.lt.s32.totalorder %s7, 3
    %p125 = pnand %p123, %p124
    %p126 = pneg %p125
    // Predicated region
    $region21: #{maxpool2d_k3_ceil.1} parent=5 // pred_check
      _
    $region22: #{maxpool2d_k3_ceil.1} parent=5 // pred_check_branch
      %128 = sbr.rel (%p125) target = $region24
    $region23: #{maxpool2d_k3_ceil.1} parent=5 // pred_region
      %s129 = ssub.s32 %s7, 1
      %s130 = smul.u32 4, %s17
      %s131 = smul.u32 6, %s18
      %p132 = scmp.lt.s32.totalorder %s130, 7
      %s133 = scalar_select %p132, %s130, 7
      %p134 = scmp.lt.s32.totalorder %s131, 5
      %s135 = scalar_select %p134, %s131, 5
      %p136 = scmp.lt.s32.totalorder %s19, 0
      %s137 = scalar_select %p136, %s19, 0
      %s138 = sadd.s32 %s137, %s135
      %s139 = smul.addr %s133, 6
      %s140 = sadd.s32 %s138, %s139
      %s141 = smul.addr %s140, 4
      %s142 = scalar_lea.vmem %s0, %s141
      %p143 = pneg %p56
      %p144 = pneg %p53
      %p145 = pneg %p86
      %p146 = pneg %p83
      %s147 = smul.u32 4, %s17
      %p148 = scmp.lt.s32.totalorder %s147, 7
      %s149 = scalar_select %p148, %s147, 7
      %p150 = scmp.lt.s32.totalorder %s18, 0
      %s151 = scalar_select %p150, %s18, 0
      %p152 = scmp.lt.s32.totalorder %s19, 0
      %s153 = scalar_select %p152, %s19, 0
      %s154 = sadd.s32 %s153, %s151
      %s155 = sadd.s32 %s154, %s149
      %s156 = smul.addr %s155, 8
      %s157 = scalar_lea.vmem %s1, %s156
      %s158 = smul.u32 4, %s17
      %s159 = smul.u32 6, %s18
      %p160 = scmp.lt.s32.totalorder %s158, 7
      %s161 = scalar_select %p160, %s158, 7
      %p162 = scmp.lt.s32.totalorder %s159, 5
      %s163 = scalar_select %p162, %s159, 5
      %p164 = scmp.lt.s32.totalorder %s19, 0
      %s165 = scalar_select %p164, %s19, 0
      %s166 = sadd.s32 %s165, %s163
      %s167 = smul.addr %s161, 6
      %s168 = sadd.s32 %s166, %s167
      %s169 = smul.addr %s168, 4
      %s170 = scalar_lea.vmem %s0, %s169
      %s171 = smul.u32 4, %s17
      %s172 = smul.u32 6, %s18
      %s173 = smul.u32 4, %s17
      %p174 = scmp.lt.s32.totalorder %s173, 7
      %s175 = scalar_select %p174, %s173, 7
      %p176 = scmp.lt.s32.totalorder %s18, 0
      %s177 = scalar_select %p176, %s18, 0
      %p178 = scmp.lt.s32.totalorder %s19, 0
      %s179 = scalar_select %p178, %s19, 0
      %s180 = sadd.s32 %s179, %s177
      %s181 = sadd.s32 %s180, %s175
      %s182 = smul.addr %s181, 8
      %s183 = scalar_lea.vmem %s1, %s182
      %s184 = smul.u32 4, %s17
      %v185 = vld [vmem:[%s170] sm:$0x1]
      %v186 = vld [vmem:[%s170 + $0x4] sm:$0x1]
      %v187 = vld [vmem:[%s170 + $0x8] sm:$0x1]
      %v188 = vld [vmem:[%s170 + $0xc] sm:$0x1]
      %v189 = vld [vmem:[%s170 + $0x10] sm:$0x1]
      %v190 = vld [vmem:[%s170 + $0x14] sm:$0x1]
      %v191 = vld [vmem:[%s170 + $0x18] sm:$0x1]
      %v192 = vld [vmem:[%s170 + $0x1c] sm:$0x1]
      %v193 = vld [vmem:[%s170 + $0x20] sm:$0x1]
      %v194 = vld [vmem:[%s170 + $0x24] sm:$0x1]
      %v195 = vld [vmem:[%s170 + $0x28] sm:$0x1]
      %v196 = vld [vmem:[%s170 + $0x2c] sm:$0x1]
      %v197 = vld [vmem:[%s170 + $0x30] sm:$0x1]
      %v198 = vld [vmem:[%s170 + $0x34] sm:$0x1]
      %v199 = vld [vmem:[%s170 + $0x38] sm:$0x1]
      %v200 = vld [vmem:[%s170 + $0x3c] sm:$0x1]
      %v201 = vld [vmem:[%s170 + $0x40] sm:$0x1]
      %v202 = vld [vmem:[%s170 + $0x44] sm:$0x1]
      %v203 = vld [vmem:[%s170 + $0x48] sm:$0x1]
      %v204 = vld [vmem:[%s170 + $0x4c] sm:$0x1]
      %v205 = vld [vmem:[%s170 + $0x50] sm:$0x1]
      %v206 = vld [vmem:[%s170 + $0x54] sm:$0x1]
      %v207 = vld [vmem:[%s170 + $0x58] sm:$0x1]
      %v208 = vld [vmem:[%s170 + $0x5c] sm:$0x1]
      %v209 = vld [vmem:[%s170 + $0x1] sm:$0x1]
      %v210 = vld [vmem:[%s170 + $0x5] sm:$0x1]
      %v211 = vld [vmem:[%s170 + $0x9] sm:$0x1]
      %v212 = vld [vmem:[%s170 + $0xd] sm:$0x1]
      %v213 = vld [vmem:[%s170 + $0x11] sm:$0x1]
      %v214 = vld [vmem:[%s170 + $0x15] sm:$0x1]
      %v215 = vld [vmem:[%s170 + $0x19] sm:$0x1]
      %v216 = vld [vmem:[%s170 + $0x1d] sm:$0x1]
      %v217 = vld [vmem:[%s170 + $0x21] sm:$0x1]
      %v218 = vld [vmem:[%s170 + $0x25] sm:$0x1]
      %v219 = vld [vmem:[%s170 + $0x29] sm:$0x1]
      %v220 = vld [vmem:[%s170 + $0x2d] sm:$0x1]
      %v221 = vld [vmem:[%s170 + $0x31] sm:$0x1]
      %v222 = vld [vmem:[%s170 + $0x35] sm:$0x1]
      %v223 = vld [vmem:[%s170 + $0x39] sm:$0x1]
      %v224 = vld [vmem:[%s170 + $0x3d] sm:$0x1]
      %v225 = vld [vmem:[%s170 + $0x41] sm:$0x1]
      %v226 = vld [vmem:[%s170 + $0x45] sm:$0x1]
      %v227 = vld [vmem:[%s170 + $0x49] sm:$0x1]
      %v228 = vld [vmem:[%s170 + $0x4d] sm:$0x1]
      %v229 = vld [vmem:[%s170 + $0x51] sm:$0x1]
      %v230 = vld [vmem:[%s170 + $0x55] sm:$0x1]
      %v231 = vld [vmem:[%s170 + $0x59] sm:$0x1]
      %v232 = vld [vmem:[%s170 + $0x5d] sm:$0x1]
      %v233 = vmax.f32 %v185, %v209
      %v234 = vmax.f32 %v186, %v210
      %v235 = vmax.f32 %v187, %v211
      %v236 = vmax.f32 %v188, %v212
      %v237 = vmax.f32 %v189, %v213
      %v238 = vmax.f32 %v190, %v214
      %v239 = vmax.f32 %v191, %v215
      %v240 = vmax.f32 %v192, %v216
      %v241 = vmax.f32 %v193, %v217
      %v242 = vmax.f32 %v194, %v218
      %v243 = vmax.f32 %v195, %v219
      %v244 = vmax.f32 %v196, %v220
      %v245 = vmax.f32 %v197, %v221
      %v246 = vmax.f32 %v198, %v222
      %v247 = vmax.f32 %v199, %v223
      %v248 = vmax.f32 %v200, %v224
      %v249 = vmax.f32 %v201, %v225
      %v250 = vmax.f32 %v202, %v226
      %v251 = vmax.f32 %v203, %v227
      %v252 = vmax.f32 %v204, %v228
      %v253 = vmax.f32 %v205, %v229
      %v254 = vmax.f32 %v206, %v230
      %v255 = vmax.f32 %v207, %v231
      %v256 = vmax.f32 %v208, %v232
      %v257 = vld [vmem:[%s170 + $0x2] sm:$0x1]
      %v258 = vld [vmem:[%s170 + $0x6] sm:$0x1]
      %v259 = vld [vmem:[%s170 + $0xa] sm:$0x1]
      %v260 = vld [vmem:[%s170 + $0xe] sm:$0x1]
      %v261 = vld [vmem:[%s170 + $0x12] sm:$0x1]
      %v262 = vld [vmem:[%s170 + $0x16] sm:$0x1]
      %v263 = vld [vmem:[%s170 + $0x1a] sm:$0x1]
      %v264 = vld [vmem:[%s170 + $0x1e] sm:$0x1]
      %v265 = vld [vmem:[%s170 + $0x22] sm:$0x1]
      %v266 = vld [vmem:[%s170 + $0x26] sm:$0x1]
      %v267 = vld [vmem:[%s170 + $0x2a] sm:$0x1]
      %v268 = vld [vmem:[%s170 + $0x2e] sm:$0x1]
      %v269 = vld [vmem:[%s170 + $0x32] sm:$0x1]
      %v270 = vld [vmem:[%s170 + $0x36] sm:$0x1]
      %v271 = vld [vmem:[%s170 + $0x3a] sm:$0x1]
      %v272 = vld [vmem:[%s170 + $0x3e] sm:$0x1]
      %v273 = vld [vmem:[%s170 + $0x42] sm:$0x1]
      %v274 = vld [vmem:[%s170 + $0x46] sm:$0x1]
      %v275 = vld [vmem:[%s170 + $0x4a] sm:$0x1]
      %v276 = vld [vmem:[%s170 + $0x4e] sm:$0x1]
      %v277 = vld [vmem:[%s170 + $0x52] sm:$0x1]
      %v278 = vld [vmem:[%s170 + $0x56] sm:$0x1]
      %v279 = vld [vmem:[%s170 + $0x5a] sm:$0x1]
      %v280 = vld [vmem:[%s170 + $0x5e] sm:$0x1]
      %v281 = vmax.f32 %v233, %v257
      %v282 = vmax.f32 %v234, %v258
      %v283 = vmax.f32 %v235, %v259
      %v284 = vmax.f32 %v236, %v260
      %v285 = vmax.f32 %v237, %v261
      %v286 = vmax.f32 %v238, %v262
      %v287 = vmax.f32 %v239, %v263
      %v288 = vmax.f32 %v240, %v264
      %v289 = vmax.f32 %v241, %v265
      %v290 = vmax.f32 %v242, %v266
      %v291 = vmax.f32 %v243, %v267
      %v292 = vmax.f32 %v244, %v268
      %v293 = vmax.f32 %v245, %v269
      %v294 = vmax.f32 %v246, %v270
      %v295 = vmax.f32 %v247, %v271
      %v296 = vmax.f32 %v248, %v272
      %v297 = vmax.f32 %v249, %v273
      %v298 = vmax.f32 %v250, %v274
      %v299 = vmax.f32 %v251, %v275
      %v300 = vmax.f32 %v252, %v276
      %v301 = vmax.f32 %v253, %v277
      %v302 = vmax.f32 %v254, %v278
      %v303 = vmax.f32 %v255, %v279
      %v304 = vmax.f32 %v256, %v280
      %v329 = vrot.slane %v282, 7
      %vm330 = vcmask 1041409
      %v331 = vsel %vm330, %v329, %v281
      %v332 = vrot.slane %v283, 6
      %vm333 = vcmask 1042434
      %v334 = vsel %vm333, %v332, %v331
      %v335 = vrot.slane %v284, 5
      %vm336 = vcmask 1043459
      %v337 = vsel %vm336, %v335, %v334
      %v338 = vrot.slane %v285, 4
      %vm339 = vcmask 1044484
      %v340 = vsel %vm339, %v338, %v337
      %v341 = vrot.slane %v286, 3
      %vm342 = vcmask 1045509
      %v343 = vsel %vm342, %v341, %v340
      %v344 = vrot.slane %v288, 7
      %v345 = vsel %vm330, %v344, %v287
      %v346 = vrot.slane %v289, 6
      %v347 = vsel %vm333, %v346, %v345
      %v348 = vrot.slane %v290, 5
      %v349 = vsel %vm336, %v348, %v347
      %v350 = vrot.slane %v291, 4
      %v351 = vsel %vm339, %v350, %v349
      %v352 = vrot.slane %v292, 3
      %v353 = vsel %vm342, %v352, %v351
      %v354 = vrot.slane %v294, 7
      %v355 = vsel %vm330, %v354, %v293
      %v356 = vrot.slane %v295, 6
      %v357 = vsel %vm333, %v356, %v355
      %v358 = vrot.slane %v296, 5
      %v359 = vsel %vm336, %v358, %v357
      %v360 = vrot.slane %v297, 4
      %v361 = vsel %vm339, %v360, %v359
      %v362 = vrot.slane %v298, 3
      %v363 = vsel %vm342, %v362, %v361
      %v364 = vrot.slane %v300, 7
      %v365 = vsel %vm330, %v364, %v299
      %v366 = vrot.slane %v301, 6
      %v367 = vsel %vm333, %v366, %v365
      %v368 = vrot.slane %v302, 5
      %v369 = vsel %vm336, %v368, %v367
      %v370 = vrot.slane %v303, 4
      %v371 = vsel %vm339, %v370, %v369
      %v372 = vrot.slane %v304, 3
      %v373 = vsel %vm342, %v372, %v371
      %vm378 = vcmask 46080
      %379 = vst.msk [vmem:[%s183] sm:$0x3f] %vm378, %v343
      %380 = vst.msk [vmem:[%s183 + $0x8] sm:$0x3f] %vm378, %v353
      %381 = vst.msk [vmem:[%s183 + $0x10] sm:$0x3f] %vm378, %v363
      %382 = vst.msk [vmem:[%s183 + $0x18] sm:$0x3f] %vm378, %v373
      %s383 = smul.u32 4, %s17
      %p384 = scmp.lt.s32.totalorder %s383, 7
      %s385 = scalar_select %p384, %s383, 7
      %p386 = scmp.lt.s32.totalorder %s18, 0
      %s387 = scalar_select %p386, %s18, 0
      %p388 = scmp.lt.s32.totalorder %s19, 0
      %s389 = scalar_select %p388, %s19, 0
      %s390 = sadd.s32 %s389, %s387
      %s391 = sadd.s32 %s390, %s385
      %s392 = smul.addr %s391, 8
      %s393 = scalar_lea.vmem %s1, %s392
      // Predicated region
      $region25: #{maxpool2d_k3_ceil.1} parent=23 // pred_check
        %p394 = pneg %p83
      $region26: #{maxpool2d_k3_ceil.1} parent=23 // pred_check_branch
        %396 = sbr.rel (%p394) target = $region28
      $region27: #{maxpool2d_k3_ceil.1} parent=23 // pred_region
        %s397 = smul.u32 4, %s17
      $region28: #{maxpool2d_k3_ceil.1} parent=23 // pred_fallthru
        _
    $region24: #{maxpool2d_k3_ceil.1} parent=5 // pred_fallthru
      _
    %p398 = scmp.le.s32.totalorder 2, %s7
    // Predicated region
    $region29: #{maxpool2d_k3_ceil.1} parent=5 // pred_check
      %p399 = pneg %p398
    $region30: #{maxpool2d_k3_ceil.1} parent=5 // pred_check_branch
      %401 = sbr.rel (%p399) target = $region32
    $region31: #{maxpool2d_k3_ceil.1} parent=5 // pred_region
      %s402 = ssub.s32 %s7, 2
      // Predicated region
      $region33: #{maxpool2d_k3_ceil.1} parent=31 // pred_check
        %p403 = pneg %p89
      $region34: #{maxpool2d_k3_ceil.1} parent=31 // pred_check_branch
        %405 = sbr.rel (%p403) target = $region36
      $region35: #{maxpool2d_k3_ceil.1} parent=31 // pred_region
        %s406 = smul.u32 4, %s20
        %p407 = scmp.lt.s32.totalorder %s406, 7
        %s408 = scalar_select %p407, %s406, 7
        %p409 = scmp.lt.s32.totalorder %s21, 0
        %s410 = scalar_select %p409, %s21, 0
        %p411 = scmp.lt.s32.totalorder %s22, 0
        %s412 = scalar_select %p411, %s22, 0
        %s413 = sadd.s32 %s412, %s410
        %s414 = sadd.s32 %s413, %s408
        %s415 = smul.addr %s414, 8
        %s416 = scalar_lea.vmem %s1, %s415
      $region36: #{maxpool2d_k3_ceil.1} parent=31 // pred_fallthru
        _
    $region32: #{maxpool2d_k3_ceil.1} parent=5 // pred_fallthru
      _
  $region6: #{maxpool2d_k3_ceil.1} parent=0 // loop_footer
    %s11 = sadd.s32 1, %s7
  $region7: #{maxpool2d_k3_ceil.1} parent=0 // loop_footer_branch
    %6 = sbr.rel target = $region3
  $region8: #{maxpool2d_k3_ceil.1} parent=0 // loop_exit
    _

</llo_original>
